<compile_context>
chip_gen: v7x
topology: tpu7x:2x2x1
jax: 0.10.0
libtpu: 0.0.40
codegen_flags: <defaults>
</compile_context>

<pallas_src>
import jax
import jax.numpy as jnp
from jax.experimental import pallas as pl
from jax.experimental.pallas import tpu as pltpu


# ----------------------------------------------------------------------------
# Path 1: zero-copy identity via input/output aliasing (input donated).
# ----------------------------------------------------------------------------
def _identity_alias_kernel(x_hbm, o_hbm):
    # Output is aliased to the input buffer (input_output_aliases={0: 0}) and
    # the module is the identity, so there is nothing to compute and nothing
    # to move. Intentionally empty; has_side_effects=True keeps it alive.
    del x_hbm, o_hbm


def _critic_forward_aliased(x):
    return pl.pallas_call(
        _identity_alias_kernel,
        out_shape=jax.ShapeDtypeStruct(x.shape, x.dtype),
        in_specs=[pl.BlockSpec(memory_space=pl.ANY)],
        out_specs=pl.BlockSpec(memory_space=pl.ANY),
        input_output_aliases={0: 0},
        compiler_params=pltpu.CompilerParams(has_side_effects=True),
    )(x)


# Donate the input so XLA does not insert a protective copy: the forward is
# then a true zero-copy identity regardless of tensor size.
critic_forward = jax.jit(_critic_forward_aliased, donate_argnums=0)


# ----------------------------------------------------------------------------
# Path 2: materialized copy (input not donatable). Direct HBM->HBM DMA(s).
# ----------------------------------------------------------------------------
def _make_chunked_copy_kernel(bounds, full_rows):
    """bounds: list of (start, size) python ints over the leading axis."""
    single_full = len(bounds) == 1 and bounds[0] == (0, full_rows)

    def kernel(x_hbm, o_hbm, sems):
        copies = []
        for k, (start, size) in enumerate(bounds):
            if single_full:
                src, dst = x_hbm, o_hbm
            else:
                # Slice only the leading axis: each descriptor stays fully
                # contiguous in HBM.
                src = x_hbm.at[pl.ds(start, size)]
                dst = o_hbm.at[pl.ds(start, size)]
            copies.append(pltpu.make_async_copy(src, dst, sems.at[k]))
        # Start all DMAs (concurrent), then wait on all of them.
        for cp in copies:
            cp.start()
        for cp in copies:
            cp.wait()

    return kernel


def critic_forward_copy(x, *, max_chunks=8, min_bytes_for_chunking=1 << 20):
    """Identity forward that materializes a fresh output buffer.

    Small inputs (< min_bytes_for_chunking) use a single HBM->HBM DMA (fixed
    per-descriptor overhead dominates, so fan-out would only add latency).
    Large inputs fan out into up to `max_chunks` concurrent contiguous DMAs
    over the leading axis.
    """
    lead = x.shape[0]
    nbytes = x.size * x.dtype.itemsize

    if nbytes < min_bytes_for_chunking or lead < 2:
        bounds = [(0, lead)]
    else:
        k = min(max_chunks, lead)
        base, rem = divmod(lead, k)
        bounds, start = [], 0
        for i in range(k):
            size = base + (1 if i < rem else 0)
            bounds.append((start, size))
            start += size

    kernel = _make_chunked_copy_kernel(bounds, lead)
    return pl.pallas_call(
        kernel,
        out_shape=jax.ShapeDtypeStruct(x.shape, x.dtype),
        # Raw HBM refs on both sides: no auto-DMA, no VMEM tiles, no grid.
        in_specs=[pl.BlockSpec(memory_space=pl.ANY)],
        out_specs=pl.BlockSpec(memory_space=pl.ANY),
        scratch_shapes=[pltpu.SemaphoreType.DMA((len(bounds),))],
        compiler_params=pltpu.CompilerParams(has_side_effects=True),
    )(x)


# TODO(synk): on v7x the copy path could additionally be sharded across both
# TensorCores (pl.core_map over pltpu.create_tensorcore_mesh, half the rows
# per core) to use both DMA issue paths; v5e/v6e have a single TC so it is
# omitted here to keep the kernel generation-portable and simple.


if __name__ == "__main__":
    key = jax.random.PRNGKey(0)
    # Shapes consistent with a DCGAN-style critic input: NCHW.
    N, C, H, W = 2, 4, 16, 16
    shape = (N, C, H, W)

    # Reference values, regenerated from the same key (the donated buffer in
    # path 1 must not be reused for the comparison).
    x_check = jax.random.normal(key, shape, dtype=jnp.float32)

    # --- Path 1: zero-copy aliased identity (input donated). ---
    x1 = jax.random.normal(key, shape, dtype=jnp.float32)
    y1 = critic_forward(x1)  # x1 is donated; do not use it afterwards.
    jax.block_until_ready(y1)
    assert y1.shape == shape and y1.dtype == jnp.float32
    assert bool(jnp.all(y1 == x_check))

    # --- Path 2a: materialized copy, single-DMA branch (small input). ---
    x2 = jax.random.normal(key, shape, dtype=jnp.float32)
    y2 = critic_forward_copy(x2)
    jax.block_until_ready(y2)
    assert y2.shape == shape and y2.dtype == jnp.float32
    assert bool(jnp.all(y2 == x_check))

    # --- Path 2b: force the multi-DMA fan-out branch to verify it as well. ---
    x3 = jax.random.normal(key, shape, dtype=jnp.float32)
    y3 = critic_forward_copy(x3, min_bytes_for_chunking=0)
    jax.block_until_ready(y3)
    assert bool(jnp.all(y3 == x_check))

    print("KERNEL_OK")
</pallas_src>

<mosaic_0001>
module attributes {stable_mosaic.version = 11 : i64} {
  func.func @_identity_alias_kernel(%arg0: memref<2x4x16x16xf32, #tpu.memory_space<any>>, %arg1: memref<2x4x16x16xf32, #tpu.memory_space<any>>) attributes {dimension_semantics = [], scalar_prefetch = 0 : i64, scratch_operands = 0 : i64, tpu.core_type = #tpu.core_type<tc>} {
    return
  }
}

</mosaic_0001>

<llo_original>
// kernel: _critic_forward_aliased.1
$region0: #{_critic_forward_aliased.1}
  #allocation0 [shape = 'u32[]', space=smem, size = 0x4, offset = 0x4, fixed_abs, tag = 'smem constant byte address 0x4 - core index']
  #allocation1 [shape = 'u32[144,128]{1,0:T(1,128)}', space=vmem, size = 0x12000, scoped, tag = 'internal scratch']
  %s0 = inlined_call_operand.hbm [shape: f32[2,4,16,16], index: 0, kind: input, shape index: {}, may-alias: {0,1}]
  %s1 = inlined_call_operand.hbm [shape: f32[2,4,16,16], index: 1, kind: output, shape index: {}, may-alias: {0,1}]
  %s2 = sld [smem:[#allocation0]]
  $region2: #{_critic_forward_aliased.1} parent=0
    _
  %s4 = ssub.s32 1, %s2
  %s5 = scalar_select 0, %s4, %s2

</llo_original>
